<compile_context>
chip_gen: v7x
topology: tpu7x:2x2x1
jax: 0.10.0
libtpu: 0.0.40
codegen_flags: <defaults>
</compile_context>

<pallas_src>
import itertools

import jax
import jax.numpy as jnp
from jax.experimental import pallas as pl
from jax.experimental.pallas import tpu as pltpu

FEAT_DIM = 128
CIN_PAD = 8          # pad input channels 3 -> 8
C1_PAD = 128         # pad conv1 output channels 64 -> 128 (lane dense)
BN_EPS = 1e-5
NORM_EPS = 1e-12     # F.normalize default eps

NUM_C3_CHUNKS = 4
C3_CHUNK = 1024 // NUM_C3_CHUNKS     # 256 output lanes per conv3 chunk


# ---------------------------------------------------------------------------
# Phase 1: encoder (folded conv+BN matmuls, ReLU, chunked conv3 + streaming max)
# ---------------------------------------------------------------------------
def _encoder_kernel(x_ref, w1_ref, b1_ref, w2_ref, b2_ref, w3_ref, b3_ref, g_ref):
    n = pl.program_id(1)

    @pl.when(n == 0)
    def _():
        g_ref[...] = jnp.full(g_ref.shape, -jnp.inf, dtype=jnp.float32)

    tb, tn, cin = x_ref.shape
    x = x_ref[...].reshape(tb * tn, cin)                              # bf16 (rows, 8)

    h = jnp.dot(x, w1_ref[...], preferred_element_type=jnp.float32) + b1_ref[...]
    h = jnp.maximum(h, 0.0)                                           # (rows, 128)
    h = jnp.dot(h.astype(jnp.bfloat16), w2_ref[...],
                preferred_element_type=jnp.float32) + b2_ref[...]
    h2 = jnp.maximum(h, 0.0).astype(jnp.bfloat16)                     # (rows, 128)

    # conv3: chunk the 1024 output lanes; b3 is deferred past the max (no ReLU after
    # conv3, so max_n(h + b3) == max_n(h) + b3).  Each chunk is reduced immediately so
    # the full (rows, 1024) f32 intermediate is never materialized.
    for c in range(NUM_C3_CHUNKS):
        c0 = c * C3_CHUNK
        h3 = jnp.dot(h2, w3_ref[:, c0:c0 + C3_CHUNK],
                     preferred_element_type=jnp.float32)              # (rows, 256)
        tile_max = jnp.max(h3.reshape(tb, tn, C3_CHUNK), axis=1,
                           keepdims=True)                             # (tb, 1, 256)
        g_ref[:, :, c0:c0 + C3_CHUNK] = jnp.maximum(
            g_ref[:, :, c0:c0 + C3_CHUNK], tile_max)

    @pl.when(n == pl.num_programs(1) - 1)
    def _():
        g_ref[...] = g_ref[...] + b3_ref[...]                         # add b3 once


# ---------------------------------------------------------------------------
# Phase 2: MLP head (Linear 1024->1024, ReLU, Linear 1024->feat) + L2 normalize
# ---------------------------------------------------------------------------
def _head_kernel(g_ref, wh1_ref, bh1_ref, wh2_ref, bh2_ref, out_ref):
    tbh = g_ref.shape[0]
    g = g_ref[...].reshape(tbh, 1024).astype(jnp.bfloat16)
    z = jnp.dot(g, wh1_ref[...], preferred_element_type=jnp.float32) + bh1_ref[...]
    z = jnp.maximum(z, 0.0)
    z = jnp.dot(z.astype(jnp.bfloat16), wh2_ref[...],
                preferred_element_type=jnp.float32) + bh2_ref[...]    # (tbh, 128)
    # F.normalize(dim=1): z / max(||z||, eps)  ==  z * rsqrt(max(||z||^2, eps^2))
    nsq = jnp.sum(z * z, axis=1, keepdims=True)
    inv = jax.lax.rsqrt(jnp.maximum(nsq, NORM_EPS * NORM_EPS))
    out_ref[...] = z * inv


# ---------------------------------------------------------------------------
# Tiling heuristics
# ---------------------------------------------------------------------------
def _rows_cap():
    # Larger point tiles on v5e/v6e (128 MiB VMEM); stay at 4096 rows on v7x (64 MiB).
    cap = 4096
    try:
        if pltpu.get_tpu_info().vmem_capacity_bytes >= (100 << 20):
            cap = 8192
    except Exception:
        pass
    return cap


def _pick_tb(B):
    # Prefer >= 2 steps on the parallel batch axis so both v7x TensorCores get work.
    for tb in (8, 4, 2, 1):
        if B % tb == 0 and B // tb >= 2:
            return tb
    for tb in (8, 4, 2, 1):
        if B % tb == 0:
            return tb
    return 1


def _pick_tn(N, tb, cap_rows):
    cap = max(8, cap_rows // tb)
    if N <= cap:
        return N
    for cand in range(cap - (cap % 8), 7, -8):
        if N % cand == 0:
            return cand
    return 8   # N % 8 == 0 is asserted by the wrapper


def _pick_tbh(B):
    if B <= 128:               # single grid step for the (memory-bound) head
        return B
    for tb in (128, 64, 32, 16, 8):
        if B % tb == 0:
            return tb
    return B


# ---------------------------------------------------------------------------
# Host wrapper
# ---------------------------------------------------------------------------
def pointnet_supcon_forward(x_ncw, params):
    """x_ncw: (B, 3, N) float32, like the PyTorch module input."""
    B, Cin, N = x_ncw.shape
    assert Cin == 3
    assert N % 8 == 0, "point count must be a multiple of 8"  # TODO(synk): ragged N padding

    # point-major layout, zero-pad channels 3 -> 8, cast to bf16 (halves input DMA)
    x_bnc = jnp.transpose(x_ncw, (0, 2, 1))                              # (B, N, 3)
    x_bnc = jnp.pad(x_bnc, ((0, 0), (0, 0), (0, CIN_PAD - Cin)))         # (B, N, 8)
    x_bnc = x_bnc.astype(jnp.bfloat16)

    (w1, b1, w2, b2, w3, b3, wh1, bh1, wh2, bh2) = params

    TB = _pick_tb(B)
    TN = _pick_tn(N, TB, _rows_cap())

    def const_spec(shape):
        return pl.BlockSpec(shape, lambda b, n: (0,) * len(shape))

    g = pl.pallas_call(
        _encoder_kernel,
        out_shape=jax.ShapeDtypeStruct((B, 1, 1024), jnp.float32),
        grid_spec=pltpu.PrefetchScalarGridSpec(
            num_scalar_prefetch=0,
            grid=(B // TB, N // TN),
            in_specs=[
                pl.BlockSpec((TB, TN, CIN_PAD), lambda b, n: (b, n, 0)),
                const_spec(w1.shape), const_spec(b1.shape),
                const_spec(w2.shape), const_spec(b2.shape),
                const_spec(w3.shape), const_spec(b3.shape),
            ],
            out_specs=pl.BlockSpec((TB, 1, 1024), lambda b, n: (b, 0, 0)),
        ),
        compiler_params=pltpu.CompilerParams(
            dimension_semantics=("parallel", "arbitrary"),
            vmem_limit_bytes=48 * 1024 * 1024),
    )(x_bnc, w1, b1, w2, b2, w3, b3)

    TBH = _pick_tbh(B)
    feats = pl.pallas_call(
        _head_kernel,
        out_shape=jax.ShapeDtypeStruct((B, FEAT_DIM), jnp.float32),
        grid_spec=pltpu.PrefetchScalarGridSpec(
            num_scalar_prefetch=0,
            grid=(B // TBH,),
            in_specs=[
                pl.BlockSpec((TBH, 1, 1024), lambda b: (b, 0, 0)),
                pl.BlockSpec(wh1.shape, lambda b: (0, 0)),
                pl.BlockSpec(bh1.shape, lambda b: (0, 0)),
                pl.BlockSpec(wh2.shape, lambda b: (0, 0)),
                pl.BlockSpec(bh2.shape, lambda b: (0, 0)),
            ],
            out_specs=pl.BlockSpec((TBH, FEAT_DIM), lambda b: (b, 0)),
        ),
        compiler_params=pltpu.CompilerParams(
            dimension_semantics=("parallel",)),
    )(g, wh1, bh1, wh2, bh2)

    return feats


# ---------------------------------------------------------------------------
# Deterministic synthetic parameters (conv + eval-mode BN folded, padded, bf16)
# ---------------------------------------------------------------------------
def make_params(key):
    counter = itertools.count()

    def rnd(shape, scale):
        k = jax.random.fold_in(key, next(counter))
        return scale * jax.random.normal(k, shape, dtype=jnp.float32)

    def conv_bn(cin, cout, cin_pad=None, cout_pad=None):
        # conv1d(kernel=1): weight (cin, cout) in point-major layout, bias (cout,)
        w = rnd((cin, cout), 1.0 / float(cin) ** 0.5)
        b = rnd((cout,), 0.02)
        # eval-mode BN params (deterministic, non-trivial)
        gamma = 1.0 + rnd((cout,), 0.05)
        beta = rnd((cout,), 0.05)
        rmean = rnd((cout,), 0.05)
        rvar = 1.0 + jnp.abs(rnd((cout,), 0.05))
        scale = gamma / jnp.sqrt(rvar + BN_EPS)
        w_eff = w * scale[None, :]
        b_eff = (b - rmean) * scale + beta
        if cin_pad is not None and cin_pad > cin:
            w_eff = jnp.pad(w_eff, ((0, cin_pad - cin), (0, 0)))
        if cout_pad is not None and cout_pad > cout:
            w_eff = jnp.pad(w_eff, ((0, 0), (0, cout_pad - cout)))
            b_eff = jnp.pad(b_eff, ((0, cout_pad - cout),))
        return w_eff, b_eff.reshape(1, -1)

    w1, b1 = conv_bn(3, 64, cin_pad=CIN_PAD, cout_pad=C1_PAD)   # (8,128), (1,128)
    w2, b2 = conv_bn(64, 128, cin_pad=C1_PAD)                   # (128,128), (1,128)
    w3, b3 = conv_bn(128, 1024)                                 # (128,1024), (1,1024)

    wh1 = rnd((1024, 1024), 1.0 / 32.0)
    bh1 = rnd((1024,), 0.02).reshape(1, 1024)
    wh2 = rnd((1024, FEAT_DIM), 1.0 / 32.0)
    bh2 = rnd((FEAT_DIM,), 0.02).reshape(1, FEAT_DIM)

    bf16 = lambda a: a.astype(jnp.bfloat16)
    return (bf16(w1), b1, bf16(w2), b2, bf16(w3), b3,
            bf16(wh1), bh1, bf16(wh2), bh2)


# ---------------------------------------------------------------------------
# Pure-JAX reference (same bf16-matmul / f32-accumulate precision as the kernel)
# ---------------------------------------------------------------------------
def reference_forward(x_ncw, params):
    (w1, b1, w2, b2, w3, b3, wh1, bh1, wh2, bh2) = params
    B, Cin, N = x_ncw.shape
    x = jnp.transpose(x_ncw, (0, 2, 1))                         # (B, N, 3)
    x = jnp.pad(x, ((0, 0), (0, 0), (0, CIN_PAD - Cin)))        # (B, N, 8)
    x2 = x.reshape(B * N, CIN_PAD).astype(jnp.bfloat16)

    h = jnp.dot(x2, w1, preferred_element_type=jnp.float32) + b1
    h = jax.nn.relu(h)
    h = jnp.dot(h.astype(jnp.bfloat16), w2, preferred_element_type=jnp.float32) + b2
    h = jax.nn.relu(h)
    h = jnp.dot(h.astype(jnp.bfloat16), w3, preferred_element_type=jnp.float32) + b3
    g = jnp.max(h.reshape(B, N, 1024), axis=1)                  # (B, 1024)

    z = jnp.dot(g.astype(jnp.bfloat16), wh1, preferred_element_type=jnp.float32) + bh1
    z = jax.nn.relu(z)
    z = jnp.dot(z.astype(jnp.bfloat16), wh2, preferred_element_type=jnp.float32) + bh2
    nsq = jnp.sum(z * z, axis=1, keepdims=True)
    return z * jax.lax.rsqrt(jnp.maximum(nsq, NORM_EPS * NORM_EPS))


if __name__ == "__main__":
    key = jax.random.PRNGKey(0)
    kx, kp = jax.random.split(key)

    B, C, N = 2, 3, 16                    # small point cloud: 2 clouds x 16 points
    x = jax.random.normal(kx, (B, C, N), dtype=jnp.float32)
    params = make_params(kp)

    out = pointnet_supcon_forward(x, params)
    out = jax.block_until_ready(out)

    ref = reference_forward(x, params)
    assert out.shape == (B, FEAT_DIM)
    assert jnp.allclose(out, ref, atol=2e-2, rtol=2e-2), "mismatch vs JAX reference"

    print("KERNEL_OK")
</pallas_src>

<mosaic_0001>
module attributes {stable_mosaic.version = 11 : i64} {
  func.func @_encoder_kernel(%arg0: i32, %arg1: i32, %arg2: memref<1x16x8xbf16, #tpu.memory_space<vmem>>, %arg3: memref<8x128xbf16, #tpu.memory_space<vmem>>, %arg4: memref<1x128xf32, #tpu.memory_space<vmem>>, %arg5: memref<128x128xbf16, #tpu.memory_space<vmem>>, %arg6: memref<1x128xf32, #tpu.memory_space<vmem>>, %arg7: memref<128x1024xbf16, #tpu.memory_space<vmem>>, %arg8: memref<1x1024xf32, #tpu.memory_space<vmem>>, %arg9: memref<1x1x1024xf32, #tpu.memory_space<vmem>>) attributes {dimension_semantics = [#tpu.dimension_semantics<parallel>, #tpu.dimension_semantics<arbitrary>], iteration_bounds = array<i64: 2, 1>, scalar_prefetch = 0 : i64, scratch_operands = 0 : i64, tpu.core_type = #tpu.core_type<tc>, window_params = [{transform_indices = @transform_0, window_bounds = array<i64: 1, 16, 8>}, {pipeline_mode = #tpu.pipeline_mode<synchronous>, transform_indices = @transform_1, window_bounds = array<i64: 8, 128>}, {pipeline_mode = #tpu.pipeline_mode<synchronous>, transform_indices = @transform_2, window_bounds = array<i64: 1, 128>}, {pipeline_mode = #tpu.pipeline_mode<synchronous>, transform_indices = @transform_3, window_bounds = array<i64: 128, 128>}, {pipeline_mode = #tpu.pipeline_mode<synchronous>, transform_indices = @transform_4, window_bounds = array<i64: 1, 128>}, {pipeline_mode = #tpu.pipeline_mode<synchronous>, transform_indices = @transform_5, window_bounds = array<i64: 128, 1024>}, {pipeline_mode = #tpu.pipeline_mode<synchronous>, transform_indices = @transform_6, window_bounds = array<i64: 1, 1024>}, {transform_indices = @transform_7, window_bounds = array<i64: 1, 1, 1024>}]} {
    %c0_i32 = arith.constant 0 : i32
    %0 = arith.cmpi eq, %arg1, %c0_i32 : i32
    %1 = arith.extui %0 : i1 to i32
    %c0_i32_0 = arith.constant 0 : i32
    %2 = arith.cmpi ne, %1, %c0_i32_0 : i32
    scf.if %2 {
      %cst_53 = arith.constant 0xFF800000 : f32
      %56 = vector.broadcast %cst_53 : f32 to vector<1x1x1024xf32>
      %c0_54 = arith.constant 0 : index
      %c0_55 = arith.constant 0 : index
      %c0_56 = arith.constant 0 : index
      %57 = vector.load %arg9[%c0_54, %c0_55, %c0_56] : memref<1x1x1024xf32, #tpu.memory_space<vmem>>, vector<1x1x1024xf32>
      tpu.vector_store %arg9[%c0_54, %c0_55, %c0_56], %56 {strides = array<i32>} : memref<1x1x1024xf32, #tpu.memory_space<vmem>>, vector<1x1x1024xf32>,
    } else {
    }
    %c0 = arith.constant 0 : index
    %c0_1 = arith.constant 0 : index
    %c0_2 = arith.constant 0 : index
    %3 = vector.load %arg2[%c0, %c0_1, %c0_2] : memref<1x16x8xbf16, #tpu.memory_space<vmem>>, vector<1x16x8xbf16>
    %4 = vector.shape_cast %3 : vector<1x16x8xbf16> to vector<16x8xbf16>
    %c0_3 = arith.constant 0 : index
    %c0_4 = arith.constant 0 : index
    %5 = vector.load %arg3[%c0_3, %c0_4] : memref<8x128xbf16, #tpu.memory_space<vmem>>, vector<8x128xbf16>
    %cst = arith.constant dense<0.000000e+00> : vector<16x128xf32>
    %6 = tpu.matmul %4, %5, %cst {dimension_numbers = #tpu.dot_dimension_numbers<[1], [0], [0], [1], [0, 0, 1, 1], [], []>} : vector<16x8xbf16>, vector<8x128xbf16>, vector<16x128xf32> -> vector<16x128xf32>
    %c0_5 = arith.constant 0 : index
    %c0_6 = arith.constant 0 : index
    %7 = vector.load %arg4[%c0_5, %c0_6] : memref<1x128xf32, #tpu.memory_space<vmem>>, vector<1x128xf32>
    %8 = vector.broadcast %7 : vector<1x128xf32> to vector<16x128xf32>
    %9 = arith.addf %6, %8 : vector<16x128xf32>
    %cst_7 = arith.constant 0.000000e+00 : f32
    %10 = vector.broadcast %cst_7 : f32 to vector<16x128xf32>
    %11 = arith.maximumf %9, %10 : vector<16x128xf32>
    %12 = arith.truncf %11 : vector<16x128xf32> to vector<16x128xbf16>
    %c0_8 = arith.constant 0 : index
    %c0_9 = arith.constant 0 : index
    %13 = vector.load %arg5[%c0_8, %c0_9] : memref<128x128xbf16, #tpu.memory_space<vmem>>, vector<128x128xbf16>
    %cst_10 = arith.constant dense<0.000000e+00> : vector<16x128xf32>
    %14 = tpu.matmul %12, %13, %cst_10 {dimension_numbers = #tpu.dot_dimension_numbers<[1], [0], [0], [1], [0, 0, 1, 1], [], []>} : vector<16x128xbf16>, vector<128x128xbf16>, vector<16x128xf32> -> vector<16x128xf32>
    %c0_11 = arith.constant 0 : index
    %c0_12 = arith.constant 0 : index
    %15 = vector.load %arg6[%c0_11, %c0_12] : memref<1x128xf32, #tpu.memory_space<vmem>>, vector<1x128xf32>
    %16 = vector.broadcast %15 : vector<1x128xf32> to vector<16x128xf32>
    %17 = arith.addf %14, %16 : vector<16x128xf32>
    %cst_13 = arith.constant 0.000000e+00 : f32
    %18 = vector.broadcast %cst_13 : f32 to vector<16x128xf32>
    %19 = arith.maximumf %17, %18 : vector<16x128xf32>
    %20 = arith.truncf %19 : vector<16x128xf32> to vector<16x128xbf16>
    %c0_14 = arith.constant 0 : index
    %c0_15 = arith.constant 0 : index
    %21 = vector.load %arg7[%c0_14, %c0_15] : memref<128x1024xbf16, #tpu.memory_space<vmem>>, vector<128x256xbf16>
    %cst_16 = arith.constant dense<0.000000e+00> : vector<16x256xf32>
    %22 = tpu.matmul %20, %21, %cst_16 {dimension_numbers = #tpu.dot_dimension_numbers<[1], [0], [0], [1], [0, 0, 1, 1], [], []>} : vector<16x128xbf16>, vector<128x256xbf16>, vector<16x256xf32> -> vector<16x256xf32>
    %23 = vector.shape_cast %22 : vector<16x256xf32> to vector<1x16x256xf32>
    %cst_17 = arith.constant dense<0xFF800000> : vector<1x256xf32>
    %24 = vector.multi_reduction <maximumf>, %23, %cst_17 [1] : vector<1x16x256xf32> to vector<1x256xf32>
    %25 = vector.shape_cast %24 : vector<1x256xf32> to vector<1x1x256xf32>
    %c0_18 = arith.constant 0 : index
    %c0_19 = arith.constant 0 : index
    %c0_20 = arith.constant 0 : index
    %26 = vector.load %arg9[%c0_18, %c0_19, %c0_20] : memref<1x1x1024xf32, #tpu.memory_space<vmem>>, vector<1x1x256xf32>
    %27 = arith.maximumf %26, %25 : vector<1x1x256xf32>
    %c0_21 = arith.constant 0 : index
    %c0_22 = arith.constant 0 : index
    %c0_23 = arith.constant 0 : index
    %28 = vector.load %arg9[%c0_21, %c0_22, %c0_23] : memref<1x1x1024xf32, #tpu.memory_space<vmem>>, vector<1x1x256xf32>
    tpu.vector_store %arg9[%c0_21, %c0_22, %c0_23], %27 {strides = array<i32>} : memref<1x1x1024xf32, #tpu.memory_space<vmem>>, vector<1x1x256xf32>,
    %c0_24 = arith.constant 0 : index
    %c256 = arith.constant 256 : index
    %29 = vector.load %arg7[%c0_24, %c256] : memref<128x1024xbf16, #tpu.memory_space<vmem>>, vector<128x256xbf16>
    %cst_25 = arith.constant dense<0.000000e+00> : vector<16x256xf32>
    %30 = tpu.matmul %20, %29, %cst_25 {dimension_numbers = #tpu.dot_dimension_numbers<[1], [0], [0], [1], [0, 0, 1, 1], [], []>} : vector<16x128xbf16>, vector<128x256xbf16>, vector<16x256xf32> -> vector<16x256xf32>
    %31 = vector.shape_cast %30 : vector<16x256xf32> to vector<1x16x256xf32>
    %cst_26 = arith.constant dense<0xFF800000> : vector<1x256xf32>
    %32 = vector.multi_reduction <maximumf>, %31, %cst_26 [1] : vector<1x16x256xf32> to vector<1x256xf32>
    %33 = vector.shape_cast %32 : vector<1x256xf32> to vector<1x1x256xf32>
    %c0_27 = arith.constant 0 : index
    %c0_28 = arith.constant 0 : index
    %c256_29 = arith.constant 256 : index
    %34 = vector.load %arg9[%c0_27, %c0_28, %c256_29] : memref<1x1x1024xf32, #tpu.memory_space<vmem>>, vector<1x1x256xf32>
    %35 = arith.maximumf %34, %33 : vector<1x1x256xf32>
    %c0_30 = arith.constant 0 : index
    %c0_31 = arith.constant 0 : index
    %c256_32 = arith.constant 256 : index
    %36 = vector.load %arg9[%c0_30, %c0_31, %c256_32] : memref<1x1x1024xf32, #tpu.memory_space<vmem>>, vector<1x1x256xf32>
    tpu.vector_store %arg9[%c0_30, %c0_31, %c256_32], %35 {strides = array<i32>} : memref<1x1x1024xf32, #tpu.memory_space<vmem>>, vector<1x1x256xf32>,
    %c0_33 = arith.constant 0 : index
    %c512 = arith.constant 512 : index
    %37 = vector.load %arg7[%c0_33, %c512] : memref<128x1024xbf16, #tpu.memory_space<vmem>>, vector<128x256xbf16>
    %cst_34 = arith.constant dense<0.000000e+00> : vector<16x256xf32>
    %38 = tpu.matmul %20, %37, %cst_34 {dimension_numbers = #tpu.dot_dimension_numbers<[1], [0], [0], [1], [0, 0, 1, 1], [], []>} : vector<16x128xbf16>, vector<128x256xbf16>, vector<16x256xf32> -> vector<16x256xf32>
    %39 = vector.shape_cast %38 : vector<16x256xf32> to vector<1x16x256xf32>
    %cst_35 = arith.constant dense<0xFF800000> : vector<1x256xf32>
    %40 = vector.multi_reduction <maximumf>, %39, %cst_35 [1] : vector<1x16x256xf32> to vector<1x256xf32>
    %41 = vector.shape_cast %40 : vector<1x256xf32> to vector<1x1x256xf32>
    %c0_36 = arith.constant 0 : index
    %c0_37 = arith.constant 0 : index
    %c512_38 = arith.constant 512 : index
    %42 = vector.load %arg9[%c0_36, %c0_37, %c512_38] : memref<1x1x1024xf32, #tpu.memory_space<vmem>>, vector<1x1x256xf32>
    %43 = arith.maximumf %42, %41 : vector<1x1x256xf32>
    %c0_39 = arith.constant 0 : index
    %c0_40 = arith.constant 0 : index
    %c512_41 = arith.constant 512 : index
    %44 = vector.load %arg9[%c0_39, %c0_40, %c512_41] : memref<1x1x1024xf32, #tpu.memory_space<vmem>>, vector<1x1x256xf32>
    tpu.vector_store %arg9[%c0_39, %c0_40, %c512_41], %43 {strides = array<i32>} : memref<1x1x1024xf32, #tpu.memory_space<vmem>>, vector<1x1x256xf32>,
    %c0_42 = arith.constant 0 : index
    %c768 = arith.constant 768 : index
    %45 = vector.load %arg7[%c0_42, %c768] : memref<128x1024xbf16, #tpu.memory_space<vmem>>, vector<128x256xbf16>
    %cst_43 = arith.constant dense<0.000000e+00> : vector<16x256xf32>
    %46 = tpu.matmul %20, %45, %cst_43 {dimension_numbers = #tpu.dot_dimension_numbers<[1], [0], [0], [1], [0, 0, 1, 1], [], []>} : vector<16x128xbf16>, vector<128x256xbf16>, vector<16x256xf32> -> vector<16x256xf32>
    %47 = vector.shape_cast %46 : vector<16x256xf32> to vector<1x16x256xf32>
    %cst_44 = arith.constant dense<0xFF800000> : vector<1x256xf32>
    %48 = vector.multi_reduction <maximumf>, %47, %cst_44 [1] : vector<1x16x256xf32> to vector<1x256xf32>
    %49 = vector.shape_cast %48 : vector<1x256xf32> to vector<1x1x256xf32>
    %c0_45 = arith.constant 0 : index
    %c0_46 = arith.constant 0 : index
    %c768_47 = arith.constant 768 : index
    %50 = vector.load %arg9[%c0_45, %c0_46, %c768_47] : memref<1x1x1024xf32, #tpu.memory_space<vmem>>, vector<1x1x256xf32>
    %51 = arith.maximumf %50, %49 : vector<1x1x256xf32>
    %c0_48 = arith.constant 0 : index
    %c0_49 = arith.constant 0 : index
    %c768_50 = arith.constant 768 : index
    %52 = vector.load %arg9[%c0_48, %c0_49, %c768_50] : memref<1x1x1024xf32, #tpu.memory_space<vmem>>, vector<1x1x256xf32>
    tpu.vector_store %arg9[%c0_48, %c0_49, %c768_50], %51 {strides = array<i32>} : memref<1x1x1024xf32, #tpu.memory_space<vmem>>, vector<1x1x256xf32>,
    %c0_i32_51 = arith.constant 0 : i32
    %53 = arith.cmpi eq, %arg1, %c0_i32_51 : i32
    %54 = arith.extui %53 : i1 to i32
    %c0_i32_52 = arith.constant 0 : i32
    %55 = arith.cmpi ne, %54, %c0_i32_52 : i32
    scf.if %55 {
      %c0_53 = arith.constant 0 : index
      %c0_54 = arith.constant 0 : index
      %c0_55 = arith.constant 0 : index
      %56 = vector.load %arg9[%c0_53, %c0_54, %c0_55] : memref<1x1x1024xf32, #tpu.memory_space<vmem>>, vector<1x1x1024xf32>
      %c0_56 = arith.constant 0 : index
      %c0_57 = arith.constant 0 : index
      %57 = vector.load %arg8[%c0_56, %c0_57] : memref<1x1024xf32, #tpu.memory_space<vmem>>, vector<1x1024xf32>
      %58 = vector.shape_cast %57 : vector<1x1024xf32> to vector<1x1x1024xf32>
      %59 = arith.addf %56, %58 : vector<1x1x1024xf32>
      %c0_58 = arith.constant 0 : index
      %c0_59 = arith.constant 0 : index
      %c0_60 = arith.constant 0 : index
      %60 = vector.load %arg9[%c0_58, %c0_59, %c0_60] : memref<1x1x1024xf32, #tpu.memory_space<vmem>>, vector<1x1x1024xf32>
      tpu.vector_store %arg9[%c0_58, %c0_59, %c0_60], %59 {strides = array<i32>} : memref<1x1x1024xf32, #tpu.memory_space<vmem>>, vector<1x1x1024xf32>,
    } else {
    }
    return
  }
  func.func @transform_0(%arg0: i32, %arg1: i32) -> (i32, i32, i32) {
    %c0_i32 = arith.constant 0 : i32
    %c0_i32_0 = arith.constant 0 : i32
    return %arg0, %arg1, %c0_i32 : i32, i32, i32
  }
  func.func @transform_1(%arg0: i32, %arg1: i32) -> (i32, i32) {
    %c0_i32 = arith.constant 0 : i32
    %c0_i32_0 = arith.constant 0 : i32
    %c0_i32_1 = arith.constant 0 : i32
    return %c0_i32, %c0_i32_0 : i32, i32
  }
  func.func @transform_2(%arg0: i32, %arg1: i32) -> (i32, i32) {
    %c0_i32 = arith.constant 0 : i32
    %c0_i32_0 = arith.constant 0 : i32
    %c0_i32_1 = arith.constant 0 : i32
    return %c0_i32, %c0_i32_0 : i32, i32
  }
  func.func @transform_3(%arg0: i32, %arg1: i32) -> (i32, i32) {
    %c0_i32 = arith.constant 0 : i32
    %c0_i32_0 = arith.constant 0 : i32
    %c0_i32_1 = arith.constant 0 : i32
    return %c0_i32, %c0_i32_0 : i32, i32
  }
  func.func @transform_4(%arg0: i32, %arg1: i32) -> (i32, i32) {
    %c0_i32 = arith.constant 0 : i32
    %c0_i32_0 = arith.constant 0 : i32
    %c0_i32_1 = arith.constant 0 : i32
    return %c0_i32, %c0_i32_0 : i32, i32
  }
  func.func @transform_5(%arg0: i32, %arg1: i32) -> (i32, i32) {
    %c0_i32 = arith.constant 0 : i32
    %c0_i32_0 = arith.constant 0 : i32
    %c0_i32_1 = arith.constant 0 : i32
    return %c0_i32, %c0_i32_0 : i32, i32
  }
  func.func @transform_6(%arg0: i32, %arg1: i32) -> (i32, i32) {
    %c0_i32 = arith.constant 0 : i32
    %c0_i32_0 = arith.constant 0 : i32
    %c0_i32_1 = arith.constant 0 : i32
    return %c0_i32, %c0_i32_0 : i32, i32
  }
  func.func @transform_7(%arg0: i32, %arg1: i32) -> (i32, i32, i32) {
    %c0_i32 = arith.constant 0 : i32
    %c0_i32_0 = arith.constant 0 : i32
    %c0_i32_1 = arith.constant 0 : i32
    return %arg0, %c0_i32, %c0_i32_0 : i32, i32, i32
  }
}

</mosaic_0001>

<llo_original>
// kernel: tpu_custom_call.1
$region0: #{tpu_custom_call.1}
  #allocation0 [shape = 'u32[]', space=smem, size = 0x4, offset = 0x4, fixed_abs, tag = 'smem constant byte address 0x4 - core index']
  #allocation1 [shape = 'u32[144,128]{1,0:T(1,128)}', space=vmem, size = 0x12000, scoped, tag = 'internal scratch']
  %s0 = inlined_call_operand.vmem [shape: bf16[2,16,8], index: 0, kind: input, shape index: {}]
  %s1 = inlined_call_operand.vmem [shape: bf16[8,128], index: 1, kind: input, shape index: {}]
  %s2 = inlined_call_operand.vmem [shape: f32[1,128], index: 2, kind: input, shape index: {}]
  %s3 = inlined_call_operand.hbm [shape: bf16[128,128], index: 3, kind: input, shape index: {}]
  %s4 = inlined_call_operand.vmem [shape: f32[1,128], index: 4, kind: input, shape index: {}]
  %s5 = inlined_call_operand.hbm [shape: bf16[128,1024], index: 5, kind: input, shape index: {}]
  %s6 = inlined_call_operand.vmem [shape: f32[1,1024], index: 6, kind: input, shape index: {}]
  %s7 = inlined_call_operand.hbm [shape: f32[2,1,1024], index: 7, kind: output, shape index: {}]
  %s8 = sld [smem:[#allocation0]]
  $region77: #{tpu_custom_call.1} parent=0
    _
  %s10 = ssub.s32 1, %s8
  %s11 = scalar_select 0, %s10, %s8
  $region1: #{tpu_custom_call.1} parent=0
    #allocation2 [shape = 'u8[32768]{0}', space=vmem, size = 0x8000, scoped, tag = 'input window, operand 3, single buffered']
    #allocation3 [shape = 's32[2]{0}', space=sflag, size = 0x8, scoped, tag = 'scoped memory for tpu_custom_call.1']
    #allocation4 [shape = 's32[2]{0}', space=sflag, size = 0x8, scoped, tag = 'scoped memory for tpu_custom_call.1']
    #allocation5 [shape = 'u8[262144]{0}', space=vmem, size = 0x40000, scoped, tag = 'input window, operand 5, single buffered']
    #allocation6 [shape = 's32[1]{0}', space=sflag, size = 0x4, scoped, tag = 'scoped memory for tpu_custom_call.1']
    #allocation7 [shape = 'u8[8192]{0}', space=vmem, size = 0x2000, scoped, tag = 'output window, operand 0']
    %12 = vsyncpa [#allocation3], 0
    %13 = vsyncpa [#allocation6], 0
    %14 = vsyncpa [#allocation4], 0
    %s15 = scalar_lea.sflag [#allocation4], 1
    %16 = vsyncpa %s15, 0
    loop: start=0, step=1, limit=4
    $region2: #{tpu_custom_call.1} parent=1 // loop_pre_header
      _
    $region3: #{tpu_custom_call.1} parent=1 // loop_header
      %s18 = sphi 0, %s22
      %p19 = scmp.ge.s32.totalorder %s18, 4
      %s25 = sphi 0, %s37
      %s26 = sphi 0, %s33
      %s27 = sphi 0, %s25
      %s28 = sphi 0, %s26
      %s29 = sphi 0, %s27
      %s30 = sphi 0, %s28
      %s42 = sphi 0, %s44
      %s45 = sphi 0, %s42
      %s46 = sphi 0, %s45
      %s62 = sphi 0, %s46
      %s66 = sphi 0, %s66
      %s68 = sphi 0, %s66
      %s69 = sphi 0, %s68
      %s83 = sphi 0, %s69
      %s87 = sphi 0, %s87
      %s89 = sphi 0, %s87
      %s90 = sphi 0, %s89
      %s104 = sphi 0, %s90
      %s108 = sphi 0, %s108
      %s110 = sphi 0, %s108
      %s111 = sphi 0, %s110
      %s125 = sphi 0, %s111
      %s129 = sphi 0, %s129
      %s131 = sphi 0, %s129
      %s132 = sphi 0, %s131
      %s146 = sphi 0, %s132
      %s150 = sphi 0, %s150
      %s152 = sphi 0, %s150
      %s153 = sphi 0, %s152
      %s167 = sphi 0, %s153
      %s171 = sphi 0, %s171
      %s173 = sphi 0, %s171
      %s174 = sphi 0, %s173
      %s188 = sphi 0, %s174
      %s194 = sphi 0, %s196
      %s197 = sphi 0, %s194
      %s198 = sphi 0, %s197
      %s214 = sphi 0, %s198
    $region4: #{tpu_custom_call.1} parent=1 // loop_header_branch
      %21 = sbr.rel (%p19) target = $region8
    $region5: #{tpu_custom_call.1} parent=1 // loop_body
      %s23 = ssub.s32 %s18, 1
      %s24 = ssub.s32 %s18, 2
      %s31 = sadd.s32 1, %s26
      %p32 = scmp.ge.s32.totalorder %s31, 1
      %s33 = scalar_select %p32, 0, %s31
      %s34 = sadd.s32 1, %s25
      %s35 = scalar_select %p32, %s34, %s25
      %p36 = scmp.ge.s32.totalorder %s35, 2
      %s37 = scalar_select %p36, 0, %s35
      %s38 = ssub.s32 %s25, %s37
      %s39 = ssub.s32 %s26, %s33
      %s40 = sor.u32 %s38, %s39
      %p41 = scmp.eq.s32.totalorder %s40, 0
      %s43 = sadd.s32 %s42, 1
      %s44 = scalar_select %p41, %s42, %s43
      %p47 = pneg %p41
      %p48 = scmp.eq.s32.totalorder %s18, 1
      %p49 = por %p47, %p48
      %p50 = scmp.ne.s32.totalorder %s42, %s45
      %p51 = scmp.eq.s32.totalorder %s18, 0
      %p52 = por %p50, %p51
      %p53 = scmp.ne.s32.totalorder %s42, %s45
      %p54 = scmp.eq.s32.totalorder %s23, 1
      %p55 = por %p53, %p54
      %p56 = scmp.ne.s32.totalorder %s45, %s46
      %p57 = scmp.eq.s32.totalorder %s23, 0
      %p58 = por %p56, %p57
      %p59 = scmp.ne.s32.totalorder %s45, %s46
      %p60 = scmp.eq.s32.totalorder %s24, 1
      %p61 = por %p59, %p60
      %p63 = scmp.ne.s32.totalorder %s46, %s62
      %p64 = scmp.eq.s32.totalorder %s24, 0
      %p65 = por %p63, %p64
      %s67 = sadd.s32 %s66, 1
      %p70 = scmp.eq.s32.totalorder %s18, 1
      %p71 = scmp.ne.s32.totalorder %s66, %s68
      %p72 = scmp.eq.s32.totalorder %s18, 0
      %p73 = por %p71, %p72
      %p74 = scmp.ne.s32.totalorder %s66, %s68
      %p75 = scmp.eq.s32.totalorder %s23, 1
      %p76 = por %p74, %p75
      %p77 = scmp.ne.s32.totalorder %s68, %s69
      %p78 = scmp.eq.s32.totalorder %s23, 0
      %p79 = por %p77, %p78
      %p80 = scmp.ne.s32.totalorder %s68, %s69
      %p81 = scmp.eq.s32.totalorder %s24, 1
      %p82 = por %p80, %p81
      %p84 = scmp.ne.s32.totalorder %s69, %s83
      %p85 = scmp.eq.s32.totalorder %s24, 0
      %p86 = por %p84, %p85
      %s88 = sadd.s32 %s87, 1
      %p91 = scmp.eq.s32.totalorder %s18, 1
      %p92 = scmp.ne.s32.totalorder %s87, %s89
      %p93 = scmp.eq.s32.totalorder %s18, 0
      %p94 = por %p92, %p93
      %p95 = scmp.ne.s32.totalorder %s87, %s89
      %p96 = scmp.eq.s32.totalorder %s23, 1
      %p97 = por %p95, %p96
      %p98 = scmp.ne.s32.totalorder %s89, %s90
      %p99 = scmp.eq.s32.totalorder %s23, 0
      %p100 = por %p98, %p99
      %p101 = scmp.ne.s32.totalorder %s89, %s90
      %p102 = scmp.eq.s32.totalorder %s24, 1
      %p103 = por %p101, %p102
      %p105 = scmp.ne.s32.totalorder %s90, %s104
      %p106 = scmp.eq.s32.totalorder %s24, 0
      %p107 = por %p105, %p106
      %s109 = sadd.s32 %s108, 1
      %p112 = scmp.eq.s32.totalorder %s18, 1
      %p113 = scmp.ne.s32.totalorder %s108, %s110
      %p114 = scmp.eq.s32.totalorder %s18, 0
      %p115 = por %p113, %p114
      %p116 = scmp.ne.s32.totalorder %s108, %s110
      %p117 = scmp.eq.s32.totalorder %s23, 1
      %p118 = por %p116, %p117
      %p119 = scmp.ne.s32.totalorder %s110, %s111
      %p120 = scmp.eq.s32.totalorder %s23, 0
      %p121 = por %p119, %p120
      %p122 = scmp.ne.s32.totalorder %s110, %s111
      %p123 = scmp.eq.s32.totalorder %s24, 1
      %p124 = por %p122, %p123
      %p126 = scmp.ne.s32.totalorder %s111, %s125
      %p127 = scmp.eq.s32.totalorder %s24, 0
      %p128 = por %p126, %p127
      %s130 = sadd.s32 %s129, 1
      %p133 = scmp.eq.s32.totalorder %s18, 1
      %p134 = scmp.ne.s32.totalorder %s129, %s131
      %p135 = scmp.eq.s32.totalorder %s18, 0
      %p136 = por %p134, %p135
      %p137 = scmp.ne.s32.totalorder %s129, %s131
      %p138 = scmp.eq.s32.totalorder %s23, 1
      %p139 = por %p137, %p138
      %p140 = scmp.ne.s32.totalorder %s131, %s132
      %p141 = scmp.eq.s32.totalorder %s23, 0
      %p142 = por %p140, %p141
      %p143 = scmp.ne.s32.totalorder %s131, %s132
      %p144 = scmp.eq.s32.totalorder %s24, 1
      %p145 = por %p143, %p144
      %p147 = scmp.ne.s32.totalorder %s132, %s146
      %p148 = scmp.eq.s32.totalorder %s24, 0
      %p149 = por %p147, %p148
      %s151 = sadd.s32 %s150, 1
      %p154 = scmp.eq.s32.totalorder %s18, 1
      %p155 = scmp.ne.s32.totalorder %s150, %s152
      %p156 = scmp.eq.s32.totalorder %s18, 0
      %p157 = por %p155, %p156
      %p158 = scmp.ne.s32.totalorder %s150, %s152
      %p159 = scmp.eq.s32.totalorder %s23, 1
      %p160 = por %p158, %p159
      %p161 = scmp.ne.s32.totalorder %s152, %s153
      %p162 = scmp.eq.s32.totalorder %s23, 0
      %p163 = por %p161, %p162
      %p164 = scmp.ne.s32.totalorder %s152, %s153
      %p165 = scmp.eq.s32.totalorder %s24, 1
      %p166 = por %p164, %p165
      %p168 = scmp.ne.s32.totalorder %s153, %s167
      %p169 = scmp.eq.s32.totalorder %s24, 0
      %p170 = por %p168, %p169
      %s172 = sadd.s32 %s171, 1
      %p175 = scmp.eq.s32.totalorder %s18, 1
      %p176 = scmp.ne.s32.totalorder %s171, %s173
      %p177 = scmp.eq.s32.totalorder %s18, 0
      %p178 = por %p176, %p177
      %p179 = scmp.ne.s32.totalorder %s171, %s173
      %p180 = scmp.eq.s32.totalorder %s23, 1
      %p181 = por %p179, %p180
      %p182 = scmp.ne.s32.totalorder %s173, %s174
      %p183 = scmp.eq.s32.totalorder %s23, 0
      %p184 = por %p182, %p183
      %p185 = scmp.ne.s32.totalorder %s173, %s174
      %p186 = scmp.eq.s32.totalorder %s24, 1
      %p187 = por %p185, %p186
      %p189 = scmp.ne.s32.totalorder %s174, %s188
      %p190 = scmp.eq.s32.totalorder %s24, 0
      %p191 = por %p189, %p190
      %s192 = ssub.s32 %s25, %s37
      %p193 = scmp.eq.s32.totalorder %s192, 0
      %s195 = sadd.s32 %s194, 1
      %s196 = scalar_select %p193, %s194, %s195
      %p199 = pneg %p193
      %p200 = scmp.eq.s32.totalorder %s18, 1
      %p201 = por %p199, %p200
      %p202 = scmp.ne.s32.totalorder %s194, %s197
      %p203 = scmp.eq.s32.totalorder %s18, 0
      %p204 = por %p202, %p203
      %p205 = scmp.ne.s32.totalorder %s194, %s197
      %p206 = scmp.eq.s32.totalorder %s23, 1
      %p207 = por %p205, %p206
      %p208 = scmp.ne.s32.totalorder %s197, %s198
      %p209 = scmp.eq.s32.totalorder %s23, 0
      %p210 = por %p208, %p209
      %p211 = scmp.ne.s32.totalorder %s197, %s198
      %p212 = scmp.eq.s32.totalorder %s24, 1
      %p213 = por %p211, %p212
      %p215 = scmp.ne.s32.totalorder %s198, %s214
      %p216 = scmp.eq.s32.totalorder %s24, 0
      %p217 = por %p215, %p216
      %p218 = scmp.le.s32.totalorder 1, %s18
      %p219 = scmp.lt.s32.totalorder %s18, 3
      %p220 = pnand %p218, %p219
      %p221 = pneg %p220
      // Predicated region
      $region9: #{tpu_custom_call.1} parent=5 // pred_check
        _
      $region10: #{tpu_custom_call.1} parent=5 // pred_check_branch
        %223 = sbr.rel (%p220) target = $region12
      $region11: #{tpu_custom_call.1} parent=5 // pred_region
        %s224 = ssub.s32 %s18, 1
        // Predicated region
        $region13: #{tpu_custom_call.1} parent=11 // pred_check
          %p225 = pneg %p79
        $region14: #{tpu_custom_call.1} parent=11 // pred_check_branch
          %227 = sbr.rel (%p225) target = $region16
        $region15: #{tpu_custom_call.1} parent=11 // pred_region
          _
        $region16: #{tpu_custom_call.1} parent=11 // pred_fallthru
          _
        // Predicated region
        $region17: #{tpu_custom_call.1} parent=11 // pred_check
          %p228 = pneg %p100
        $region18: #{tpu_custom_call.1} parent=11 // pred_check_branch
          %230 = sbr.rel (%p228) target = $region20
        $region19: #{tpu_custom_call.1} parent=11 // pred_region
          _
        $region20: #{tpu_custom_call.1} parent=11 // pred_fallthru
          _
        // Predicated region
        $region21: #{tpu_custom_call.1} parent=11 // pred_check
          %p231 = pneg %p121
        $region22: #{tpu_custom_call.1} parent=11 // pred_check_branch
          %233 = sbr.rel (%p231) target = $region24
        $region23: #{tpu_custom_call.1} parent=11 // pred_region
          %s235 = ssub.s32 1024, 1024
          %236 = vsyncadd [#allocation3], %s235
          %s237 = sshll.u32 [#allocation2], 4
          %s238 = int_to_ptr.vmem [resolvable:$true] %s237
          %243 = dma.hbm_to_vmem [thread:$0]  %s3, 1024, %s238, [#allocation3], 64, 64, 4
        $region24: #{tpu_custom_call.1} parent=11 // pred_fallthru
          _
        // Predicated region
        $region25: #{tpu_custom_call.1} parent=11 // pred_check
          %p244 = pneg %p142
        $region26: #{tpu_custom_call.1} parent=11 // pred_check_branch
          %246 = sbr.rel (%p244) target = $region28
        $region27: #{tpu_custom_call.1} parent=11 // pred_region
          _
        $region28: #{tpu_custom_call.1} parent=11 // pred_fallthru
          _
        // Predicated region
        $region29: #{tpu_custom_call.1} parent=11 // pred_check
          %p247 = pneg %p163
        $region30: #{tpu_custom_call.1} parent=11 // pred_check_branch
          %249 = sbr.rel (%p247) target = $region32
        $region31: #{tpu_custom_call.1} parent=11 // pred_region
          %s251 = ssub.s32 8192, 8192
          %252 = vsyncadd [#allocation6], %s251
          %s253 = sshll.u32 [#allocation5], 4
          %s254 = int_to_ptr.vmem [resolvable:$true] %s253
          %259 = dma.hbm_to_vmem [thread:$0]  %s5, 8192, %s254, [#allocation6], 512, 512, 32
        $region32: #{tpu_custom_call.1} parent=11 // pred_fallthru
          _
        // Predicated region
        $region33: #{tpu_custom_call.1} parent=11 // pred_check
          %p260 = pneg %p184
        $region34: #{tpu_custom_call.1} parent=11 // pred_check_branch
          %262 = sbr.rel (%p260) target = $region36
        $region35: #{tpu_custom_call.1} parent=11 // pred_region
          _
        $region36: #{tpu_custom_call.1} parent=11 // pred_fallthru
          _
      $region12: #{tpu_custom_call.1} parent=5 // pred_fallthru
        _
      %p263 = scmp.lt.s32.totalorder %s18, 2
      // Predicated region
      $region37: #{tpu_custom_call.1} parent=5 // pred_check
        %p264 = pneg %p263
      $region38: #{tpu_custom_call.1} parent=5 // pred_check_branch
        %266 = sbr.rel (%p264) target = $region40
      $region39: #{tpu_custom_call.1} parent=5 // pred_region
        // Predicated region
        $region41: #{tpu_custom_call.1} parent=39 // pred_check
          %p267 = pneg %p52
        $region42: #{tpu_custom_call.1} parent=39 // pred_check_branch
          %269 = sbr.rel (%p267) target = $region44
        $region43: #{tpu_custom_call.1} parent=39 // pred_region
          %s270 = smul.u32 2, %s26
          %p271 = scmp.lt.s32.totalorder %s25, 1
          %s272 = scalar_select %p271, %s25, 1
          %p273 = scmp.lt.s32.totalorder %s270, 1
          %s274 = scalar_select %p273, %s270, 1
          %s275 = smul.addr %s272, 2
          %s276 = sadd.s32 %s274, %s275
          %s277 = smul.addr %s276, 4
          %s278 = scalar_lea.vmem %s0, %s277
          %s279 = smul.u32 2, %s26
        $region44: #{tpu_custom_call.1} parent=39 // pred_fallthru
          _
      $region40: #{tpu_custom_call.1} parent=5 // pred_fallthru
        _
      %p280 = scmp.le.s32.totalorder 1, %s18
      %p281 = scmp.lt.s32.totalorder %s18, 3
      %p282 = pnand %p280, %p281
      %p283 = pneg %p282
      // Predicated region
      $region45: #{tpu_custom_call.1} parent=5 // pred_check
        _
      $region46: #{tpu_custom_call.1} parent=5 // pred_check_branch
        %285 = sbr.rel (%p282) target = $region48
      $region47: #{tpu_custom_call.1} parent=5 // pred_region
        %s286 = ssub.s32 %s18, 1
        // Predicated region
        $region49: #{tpu_custom_call.1} parent=47 // pred_check
          %p287 = pneg %p121
        $region50: #{tpu_custom_call.1} parent=47 // pred_check_branch
          %289 = sbr.rel (%p287) target = $region52
        $region51: #{tpu_custom_call.1} parent=47 // pred_region
          %290 = dma.done [#allocation3], 1024
        $region52: #{tpu_custom_call.1} parent=47 // pred_fallthru
          _
        // Predicated region
        $region53: #{tpu_custom_call.1} parent=47 // pred_check
          %p291 = pneg %p163
        $region54: #{tpu_custom_call.1} parent=47 // pred_check_branch
          %293 = sbr.rel (%p291) target = $region56
        $region55: #{tpu_custom_call.1} parent=47 // pred_region
          %294 = dma.done [#allocation6], 8192
        $region56: #{tpu_custom_call.1} parent=47 // pred_fallthru
          _
        %s295 = smul.u32 2, %s28
        %p296 = scmp.lt.s32.totalorder %s27, 1
        %s297 = scalar_select %p296, %s27, 1
        %p298 = scmp.lt.s32.totalorder %s295, 1
        %s299 = scalar_select %p298, %s295, 1
        %s300 = smul.addr %s297, 2
        %s301 = sadd.s32 %s299, %s300
        %s302 = smul.addr %s301, 4
        %s303 = scalar_lea.vmem %s0, %s302
        %p304 = pneg %p58
        %p305 = pneg %p55
        %p306 = pneg %p79
        %p307 = pneg %p76
        %p308 = pneg %p100
        %p309 = pneg %p97
        %p310 = pneg %p121
        %p311 = pneg %p118
        %p312 = pneg %p142
        %p313 = pneg %p139
        %p314 = pneg %p163
        %p315 = pneg %p160
        %p316 = pneg %p184
        %p317 = pneg %p181
        %p318 = pneg %p210
        %p319 = pneg %p207
        %s320 = sand.u32 %s197, 1
        %s321 = scalar_lea.sflag [#allocation4], %s320
        %s322 = sand.u32 %s197, 1
        %s323 = smul.addr %s322, 8
        %s324 = scalar_lea.vmem [#allocation7], %s323
        %s325 = smul.u32 2, %s28
        %p326 = scmp.lt.s32.totalorder %s27, 1
        %s327 = scalar_select %p326, %s27, 1
        %p328 = scmp.lt.s32.totalorder %s325, 1
        %s329 = scalar_select %p328, %s325, 1
        %s330 = smul.addr %s327, 2
        %s331 = sadd.s32 %s329, %s330
        %s332 = smul.addr %s331, 4
        %s333 = scalar_lea.vmem %s0, %s332
        %s334 = smul.u32 2, %s28
        %p336 = scmp.eq.s32.totalorder %s28, 0
        // Predicated region
        $region57: #{tpu_custom_call.1} parent=47 // pred_check
          %p337 = pneg %p336
        $region58: #{tpu_custom_call.1} parent=47 // pred_check_branch
          %339 = sbr.rel (%p337) target = $region60
        $region59: #{tpu_custom_call.1} parent=47 // pred_region
          %340 = vst [vmem:[%s324] sm:$0xff] -inf
        $region60: #{tpu_custom_call.1} parent=47 // pred_fallthru
          _
        %v341 = vld [vmem:[%s333] sm:$0xf]
        %v342 = vld [vmem:[%s333 + $0x4] sm:$0xf]
        %v343 = vld [vmem:[%s1] sm:$0xf]
        %v344 = vld [vmem:[%s2] sm:$0x1]
        %v346 = vlaneseq
        %v347 = vshrl.u32 %v346, 7
        %v348 = vsub.s32 0, %v347
        %v349 = vrot.slane %v344, %v348
        %v353 = vunpack.c.l.b16 %v341
        %v354 = vunpack.c.l.b16 %v342
        %v355 = vpack.c.b16 %v354, %v353
        %vm356 = vcmask 64512
        %v358 = vsel %vm356, %v355, 0
        %vm360 = vcmask 1043456
        %v362 = vsel %vm360, %v343, 0
        %364 = vmatprep.subr.bf16.mxu0 0
        %365 = vmatpush1.bf16.msra.mxu0 %v362
        %366 = vmatprep.subr.bf16.mxu0 0
        %367 = vmatpush1.bf16.msra.mxu0 0
        %368 = vmatprep.subr.bf16.mxu0 0
        %369 = vmatpush1.bf16.msra.mxu0 0
        %370 = vmatprep.subr.bf16.mxu0 0
        %371 = vmatpush1.bf16.msra.mxu0 0
        %372 = vmatprep.subr.bf16.mxu0 0
        %373 = vmatpush1.bf16.msra.mxu0 0
        %374 = vmatprep.subr.bf16.mxu0 0
        %375 = vmatpush1.bf16.msra.mxu0 0
        %376 = vmatprep.subr.bf16.mxu0 0
        %377 = vmatpush1.bf16.msra.mxu0 0
        %378 = vmatprep.subr.bf16.mxu0 0
        %379 = vmatpush1.bf16.msra.mxu0 0
        %380 = vmatprep.subr.bf16.mxu0 0
        %381 = vmatpush1.bf16.msra.mxu0 0
        %382 = vmatprep.subr.bf16.mxu0 0
        %383 = vmatpush1.bf16.msra.mxu0 0
        %384 = vmatprep.subr.bf16.mxu0 0
        %385 = vmatpush1.bf16.msra.mxu0 0
        %386 = vmatprep.subr.bf16.mxu0 0
        %387 = vmatpush1.bf16.msra.mxu0 0
        %388 = vmatprep.subr.bf16.mxu0 0
        %389 = vmatpush1.bf16.msra.mxu0 0
        %390 = vmatprep.subr.bf16.mxu0 0
        %391 = vmatpush1.bf16.msra.mxu0 0
        %392 = vmatprep.subr.bf16.mxu0 0
        %393 = vmatpush1.bf16.msra.mxu0 0
        %394 = vmatprep.subr.bf16.mxu0 0
        %395 = vmatpush1.bf16.msra.mxu0 0
        %396 = vmatprep.mubr.bf16.mxu0 0
        %397 = vmatmul.mubr.bf16.gmra.mrb[0].mxu0 %v358
        %v398 = vpop.f32.mrb[0].mxu0
        %v399 = vadd.f32 %v349, %v398
        %v400 = vpop.f32.mrb[0].mxu0
        %v401 = vpop.f32.mrb[0].mxu0
        %v402 = vadd.f32 %v349, %v401
        %v403 = vpop.f32.mrb[0].mxu0
        %404 = vdwg.mxu0
        %v405 = vmax.f32 %v399, 0.0
        %v406 = vmax.f32 %v402, 0.0
        %v407 = vpack.c.bf16 %v406, %v405
        %v408 = vld [vmem:[#allocation2] sm:$0xf]
        %v409 = vld [vmem:[#allocation2 + $0x4] sm:$0xf]
        %v410 = vld [vmem:[#allocation2 + $0x8] sm:$0xf]
        %v411 = vld [vmem:[#allocation2 + $0xc] sm:$0xf]
        %v412 = vld [vmem:[#allocation2 + $0x10] sm:$0xf]
        %v413 = vld [vmem:[#allocation2 + $0x14] sm:$0xf]
        %v414 = vld [vmem:[#allocation2 + $0x18] sm:$0xf]
        %v415 = vld [vmem:[#allocation2 + $0x1c] sm:$0xf]
        %v416 = vld [vmem:[#allocation2 + $0x20] sm:$0xf]
        %v417 = vld [vmem:[#allocation2 + $0x24] sm:$0xf]
        %v418 = vld [vmem:[#allocation2 + $0x28] sm:$0xf]
        %v419 = vld [vmem:[#allocation2 + $0x2c] sm:$0xf]
        %v420 = vld [vmem:[#allocation2 + $0x30] sm:$0xf]
        %v421 = vld [vmem:[#allocation2 + $0x34] sm:$0xf]
        %v422 = vld [vmem:[#allocation2 + $0x38] sm:$0xf]
        %v423 = vld [vmem:[#allocation2 + $0x3c] sm:$0xf]
        %v424 = vld [vmem:[%s4] sm:$0x1]
        %v426 = vlaneseq
        %v427 = vshrl.u32 %v426, 7
        %v428 = vsub.s32 0, %v427
        %v429 = vrot.slane %v424, %v428
        %v447 = vunpack.c.l.b16 %v408
        %v448 = vunpack.c.l.b16 %v409
        %v449 = vunpack.c.l.b16 %v410
        %v450 = vunpack.c.l.b16 %v411
        %v451 = vunpack.c.l.b16 %v412
        %v452 = vunpack.c.l.b16 %v413
        %v453 = vunpack.c.l.b16 %v414
        %v454 = vunpack.c.l.b16 %v415
        %v455 = vunpack.c.l.b16 %v416
        %v456 = vunpack.c.l.b16 %v417
        %v457 = vunpack.c.l.b16 %v418
        %v458 = vunpack.c.l.b16 %v419
        %v459 = vunpack.c.l.b16 %v420
        %v460 = vunpack.c.l.b16 %v421
        %v461 = vunpack.c.l.b16 %v422
        %v462 = vunpack.c.l.b16 %v423
        %v463 = vpack.c.b16 %v448, %v447
        %v464 = vpack.c.b16 %v450, %v449
        %v465 = vpack.c.b16 %v452, %v451
        %v466 = vpack.c.b16 %v454, %v453
        %v467 = vpack.c.b16 %v456, %v455
        %v468 = vpack.c.b16 %v458, %v457
        %v469 = vpack.c.b16 %v460, %v459
        %v470 = vpack.c.b16 %v462, %v461
        %479 = vmatprep.subr.bf16.mxu0 0
        %480 = vmatpush1.bf16.msra.mxu0 %v463
        %481 = vmatprep.subr.bf16.mxu0 0
        %482 = vmatpush1.bf16.msra.mxu0 %v464
        %483 = vmatprep.subr.bf16.mxu0 0
        %484 = vmatpush1.bf16.msra.mxu0 %v465
        %485 = vmatprep.subr.bf16.mxu0 0
        %486 = vmatpush1.bf16.msra.mxu0 %v466
        %487 = vmatprep.subr.bf16.mxu0 0
        %488 = vmatpush1.bf16.msra.mxu0 %v467
        %489 = vmatprep.subr.bf16.mxu0 0
        %490 = vmatpush1.bf16.msra.mxu0 %v468
        %491 = vmatprep.subr.bf16.mxu0 0
        %492 = vmatpush1.bf16.msra.mxu0 %v469
        %493 = vmatprep.subr.bf16.mxu0 0
        %494 = vmatpush1.bf16.msra.mxu0 %v470
        %495 = vmatprep.subr.bf16.mxu0 0
        %496 = vmatpush1.bf16.msra.mxu0 0
        %497 = vmatprep.subr.bf16.mxu0 0
        %498 = vmatpush1.bf16.msra.mxu0 0
        %499 = vmatprep.subr.bf16.mxu0 0
        %500 = vmatpush1.bf16.msra.mxu0 0
        %501 = vmatprep.subr.bf16.mxu0 0
        %502 = vmatpush1.bf16.msra.mxu0 0
        %503 = vmatprep.subr.bf16.mxu0 0
        %504 = vmatpush1.bf16.msra.mxu0 0
        %505 = vmatprep.subr.bf16.mxu0 0
        %506 = vmatpush1.bf16.msra.mxu0 0
        %507 = vmatprep.subr.bf16.mxu0 0
        %508 = vmatpush1.bf16.msra.mxu0 0
        %509 = vmatprep.subr.bf16.mxu0 0
        %510 = vmatpush1.bf16.msra.mxu0 0
        %511 = vmatprep.mubr.bf16.mxu0 0
        %512 = vmatmul.mubr.bf16.gmra.mrb[0].mxu0 %v407
        %v513 = vpop.f32.mrb[0].mxu0
        %v514 = vadd.f32 %v429, %v513
        %v515 = vpop.f32.mrb[0].mxu0
        %v516 = vpop.f32.mrb[0].mxu0
        %v517 = vadd.f32 %v429, %v516
        %v518 = vpop.f32.mrb[0].mxu0
        %519 = vdwg.mxu0
        %v520 = vmax.f32 %v514, 0.0
        %v521 = vmax.f32 %v517, 0.0
        %v522 = vpack.c.bf16 %v521, %v520
        %v523 = vld [vmem:[#allocation5] sm:$0xff]
        %v524 = vld [vmem:[#allocation5 + $0x20] sm:$0xff]
        %v525 = vld [vmem:[#allocation5 + $0x40] sm:$0xff]
        %v526 = vld [vmem:[#allocation5 + $0x60] sm:$0xff]
        %v527 = vld [vmem:[#allocation5 + $0x80] sm:$0xff]
        %v528 = vld [vmem:[#allocation5 + $0xa0] sm:$0xff]
        %v529 = vld [vmem:[#allocation5 + $0xc0] sm:$0xff]
        %v530 = vld [vmem:[#allocation5 + $0xe0] sm:$0xff]
        %v531 = vld [vmem:[#allocation5 + $0x100] sm:$0xff]
        %v532 = vld [vmem:[#allocation5 + $0x120] sm:$0xff]
        %v533 = vld [vmem:[#allocation5 + $0x140] sm:$0xff]
        %v534 = vld [vmem:[#allocation5 + $0x160] sm:$0xff]
        %v535 = vld [vmem:[#allocation5 + $0x180] sm:$0xff]
        %v536 = vld [vmem:[#allocation5 + $0x1a0] sm:$0xff]
        %v537 = vld [vmem:[#allocation5 + $0x1c0] sm:$0xff]
        %v538 = vld [vmem:[#allocation5 + $0x1e0] sm:$0xff]
        %v555 = vunpack.c.l.b16 %v523
        %v556 = vunpack.c.h.b16 %v523
        %v557 = vunpack.c.l.b16 %v524
        %v558 = vunpack.c.h.b16 %v524
        %v559 = vunpack.c.l.b16 %v525
        %v560 = vunpack.c.h.b16 %v525
        %v561 = vunpack.c.l.b16 %v526
        %v562 = vunpack.c.h.b16 %v526
        %v563 = vunpack.c.l.b16 %v527
        %v564 = vunpack.c.h.b16 %v527
        %v565 = vunpack.c.l.b16 %v528
        %v566 = vunpack.c.h.b16 %v528
        %v567 = vunpack.c.l.b16 %v529
        %v568 = vunpack.c.h.b16 %v529
        %v569 = vunpack.c.l.b16 %v530
        %v570 = vunpack.c.h.b16 %v530
        %v571 = vunpack.c.l.b16 %v531
        %v572 = vunpack.c.h.b16 %v531
        %v573 = vunpack.c.l.b16 %v532
        %v574 = vunpack.c.h.b16 %v532
        %v575 = vunpack.c.l.b16 %v533
        %v576 = vunpack.c.h.b16 %v533
        %v577 = vunpack.c.l.b16 %v534
        %v578 = vunpack.c.h.b16 %v534
        %v579 = vunpack.c.l.b16 %v535
        %v580 = vunpack.c.h.b16 %v535
        %v581 = vunpack.c.l.b16 %v536
        %v582 = vunpack.c.h.b16 %v536
        %v583 = vunpack.c.l.b16 %v537
        %v584 = vunpack.c.h.b16 %v537
        %v585 = vunpack.c.l.b16 %v538
        %v586 = vunpack.c.h.b16 %v538
        %v587 = vpack.c.b16 %v557, %v555
        %v588 = vpack.c.b16 %v558, %v556
        %v589 = vpack.c.b16 %v561, %v559
        %v590 = vpack.c.b16 %v562, %v560
        %v591 = vpack.c.b16 %v565, %v563
        %v592 = vpack.c.b16 %v566, %v564
        %v593 = vpack.c.b16 %v569, %v567
        %v594 = vpack.c.b16 %v570, %v568
        %v595 = vpack.c.b16 %v573, %v571
        %v596 = vpack.c.b16 %v574, %v572
        %v597 = vpack.c.b16 %v577, %v575
        %v598 = vpack.c.b16 %v578, %v576
        %v599 = vpack.c.b16 %v581, %v579
        %v600 = vpack.c.b16 %v582, %v580
        %v601 = vpack.c.b16 %v585, %v583
        %v602 = vpack.c.b16 %v586, %v584
        %619 = vmatprep.subr.bf16.mxu0 %v588
        %620 = vmatpush1.bf16.msra.mxu0 %v587
        %621 = vmatprep.subr.bf16.mxu0 %v590
        %622 = vmatpush1.bf16.msra.mxu0 %v589
        %623 = vmatprep.subr.bf16.mxu0 %v592
        %624 = vmatpush1.bf16.msra.mxu0 %v591
        %625 = vmatprep.subr.bf16.mxu0 %v594
        %626 = vmatpush1.bf16.msra.mxu0 %v593
        %627 = vmatprep.subr.bf16.mxu0 %v596
        %628 = vmatpush1.bf16.msra.mxu0 %v595
        %629 = vmatprep.subr.bf16.mxu0 %v598
        %630 = vmatpush1.bf16.msra.mxu0 %v597
        %631 = vmatprep.subr.bf16.mxu0 %v600
        %632 = vmatpush1.bf16.msra.mxu0 %v599
        %633 = vmatprep.subr.bf16.mxu0 %v602
        %634 = vmatpush1.bf16.msra.mxu0 %v601
        %635 = vmatprep.subr.bf16.mxu0 0
        %636 = vmatpush1.bf16.msra.mxu0 0
        %637 = vmatprep.subr.bf16.mxu0 0
        %638 = vmatpush1.bf16.msra.mxu0 0
        %639 = vmatprep.subr.bf16.mxu0 0
        %640 = vmatpush1.bf16.msra.mxu0 0
        %641 = vmatprep.subr.bf16.mxu0 0
        %642 = vmatpush1.bf16.msra.mxu0 0
        %643 = vmatprep.subr.bf16.mxu0 0
        %644 = vmatpush1.bf16.msra.mxu0 0
        %645 = vmatprep.subr.bf16.mxu0 0
        %646 = vmatpush1.bf16.msra.mxu0 0
        %647 = vmatprep.subr.bf16.mxu0 0
        %648 = vmatpush1.bf16.msra.mxu0 0
        %649 = vmatprep.subr.bf16.mxu0 0
        %650 = vmatpush1.bf16.msra.mxu0 0
        %651 = vmatprep.mubr.bf16.mxu0 0
        %652 = vmatmul.mubr.bf16.gmra.mrb[0].mxu0 %v522
        %v653 = vpop.f32.mrb[0].mxu0
        %v654 = vadd.f32 0.0, %v653
        %v655 = vpop.f32.mrb[0].mxu0
        %v656 = vadd.f32 0.0, %v655
        %v657 = vpop.f32.mrb[0].mxu0
        %v658 = vadd.f32 0.0, %v657
        %v659 = vpop.f32.mrb[0].mxu0
        %v660 = vadd.f32 0.0, %v659
        %661 = vdwg.mxu0
        %v662 = vmax.f32 %v654, %v658
        %v663 = vrot.slane %v662, 4
        %v664 = vmax.f32 %v662, %v663
        %v665 = vrot.slane %v664, 2
        %v666 = vmax.f32 %v664, %v665
        %v667 = vrot.slane %v666, 1
        %v668 = vmax.f32 %v666, %v667
        %v669 = vmax.f32 %v656, %v660
        %v670 = vrot.slane %v669, 4
        %v671 = vmax.f32 %v669, %v670
        %v672 = vrot.slane %v671, 2
        %v673 = vmax.f32 %v671, %v672
        %v674 = vrot.slane %v673, 1
        %v675 = vmax.f32 %v673, %v674
        %v676 = vld [vmem:[%s324] sm:$0x3]
        %v679 = vcombine.low %v668, %v675
        %v681 = vunpack.c.l.s4 1966171168
        %v682 = vunpack.c.0.s8 %v681
        %v683 = vlaneseq
        %v684 = vshrl.u32 %v683, 7
        %v685 = vsub.s32 %v682, %v684
        %v686 = vrot.slane %v679, %v685
        %v688 = vunpack.c.l.s4 1966171168
        %v689 = vunpack.c.0.s8 %v688
        %v690 = vlaneseq
        %v691 = vshrl.u32 %v690, 7
        %v692 = vsub.s32 %v689, %v691
        %v693 = vrot.slane %v686, %v692
        %v695 = vmax.f32 %v676, %v693
        %v696 = vlaneseq
        %vm697 = vcmp.ge.s32.totalorder %v696, 0
        %vm698 = vcmp.lt.s32.totalorder %v696, 256
        %vm699 = vmand %vm697, %vm698
        %700 = vst.msk [vmem:[%s324] sm:$0x3] %vm699, %v695
        %v701 = vld [vmem:[#allocation5 + $0x8] sm:$0xff]
        %v702 = vld [vmem:[#allocation5 + $0x28] sm:$0xff]
        %v703 = vld [vmem:[#allocation5 + $0x48] sm:$0xff]
        %v704 = vld [vmem:[#allocation5 + $0x68] sm:$0xff]
        %v705 = vld [vmem:[#allocation5 + $0x88] sm:$0xff]
        %v706 = vld [vmem:[#allocation5 + $0xa8] sm:$0xff]
        %v707 = vld [vmem:[#allocation5 + $0xc8] sm:$0xff]
        %v708 = vld [vmem:[#allocation5 + $0xe8] sm:$0xff]
        %v709 = vld [vmem:[#allocation5 + $0x108] sm:$0xff]
        %v710 = vld [vmem:[#allocation5 + $0x128] sm:$0xff]
        %v711 = vld [vmem:[#allocation5 + $0x148] sm:$0xff]
        %v712 = vld [vmem:[#allocation5 + $0x168] sm:$0xff]
        %v713 = vld [vmem:[#allocation5 + $0x188] sm:$0xff]
        %v714 = vld [vmem:[#allocation5 + $0x1a8] sm:$0xff]
        %v715 = vld [vmem:[#allocation5 + $0x1c8] sm:$0xff]
        %v716 = vld [vmem:[#allocation5 + $0x1e8] sm:$0xff]
        %v733 = vunpack.c.l.b16 %v701
        %v734 = vunpack.c.h.b16 %v701
        %v735 = vunpack.c.l.b16 %v702
        %v736 = vunpack.c.h.b16 %v702
        %v737 = vunpack.c.l.b16 %v703
        %v738 = vunpack.c.h.b16 %v703
        %v739 = vunpack.c.l.b16 %v704
        %v740 = vunpack.c.h.b16 %v704
        %v741 = vunpack.c.l.b16 %v705
        %v742 = vunpack.c.h.b16 %v705
        %v743 = vunpack.c.l.b16 %v706
        %v744 = vunpack.c.h.b16 %v706
        %v745 = vunpack.c.l.b16 %v707
        %v746 = vunpack.c.h.b16 %v707
        %v747 = vunpack.c.l.b16 %v708
        %v748 = vunpack.c.h.b16 %v708
        %v749 = vunpack.c.l.b16 %v709
        %v750 = vunpack.c.h.b16 %v709
        %v751 = vunpack.c.l.b16 %v710
        %v752 = vunpack.c.h.b16 %v710
        %v753 = vunpack.c.l.b16 %v711
        %v754 = vunpack.c.h.b16 %v711
        %v755 = vunpack.c.l.b16 %v712
        %v756 = vunpack.c.h.b16 %v712
        %v757 = vunpack.c.l.b16 %v713
        %v758 = vunpack.c.h.b16 %v713
        %v759 = vunpack.c.l.b16 %v714
        %v760 = vunpack.c.h.b16 %v714
        %v761 = vunpack.c.l.b16 %v715
        %v762 = vunpack.c.h.b16 %v715
        %v763 = vunpack.c.l.b16 %v716
        %v764 = vunpack.c.h.b16 %v716
        %v765 = vpack.c.b16 %v735, %v733
        %v766 = vpack.c.b16 %v736, %v734
        %v767 = vpack.c.b16 %v739, %v737
        %v768 = vpack.c.b16 %v740, %v738
        %v769 = vpack.c.b16 %v743, %v741
        %v770 = vpack.c.b16 %v744, %v742
        %v771 = vpack.c.b16 %v747, %v745
        %v772 = vpack.c.b16 %v748, %v746
        %v773 = vpack.c.b16 %v751, %v749
        %v774 = vpack.c.b16 %v752, %v750
        %v775 = vpack.c.b16 %v755, %v753
        %v776 = vpack.c.b16 %v756, %v754
        %v777 = vpack.c.b16 %v759, %v757
        %v778 = vpack.c.b16 %v760, %v758
        %v779 = vpack.c.b16 %v763, %v761
        %v780 = vpack.c.b16 %v764, %v762
        %797 = vmatprep.subr.bf16.mxu0 %v766
        %798 = vmatpush1.bf16.msra.mxu0 %v765
        %799 = vmatprep.subr.bf16.mxu0 %v768
        %800 = vmatpush1.bf16.msra.mxu0 %v767
        %801 = vmatprep.subr.bf16.mxu0 %v770
        %802 = vmatpush1.bf16.msra.mxu0 %v769
        %803 = vmatprep.subr.bf16.mxu0 %v772
        %804 = vmatpush1.bf16.msra.mxu0 %v771
        %805 = vmatprep.subr.bf16.mxu0 %v774
        %806 = vmatpush1.bf16.msra.mxu0 %v773
        %807 = vmatprep.subr.bf16.mxu0 %v776
        %808 = vmatpush1.bf16.msra.mxu0 %v775
        %809 = vmatprep.subr.bf16.mxu0 %v778
        %810 = vmatpush1.bf16.msra.mxu0 %v777
        %811 = vmatprep.subr.bf16.mxu0 %v780
        %812 = vmatpush1.bf16.msra.mxu0 %v779
        %813 = vmatprep.subr.bf16.mxu0 0
        %814 = vmatpush1.bf16.msra.mxu0 0
        %815 = vmatprep.subr.bf16.mxu0 0
        %816 = vmatpush1.bf16.msra.mxu0 0
        %817 = vmatprep.subr.bf16.mxu0 0
        %818 = vmatpush1.bf16.msra.mxu0 0
        %819 = vmatprep.subr.bf16.mxu0 0
        %820 = vmatpush1.bf16.msra.mxu0 0
        %821 = vmatprep.subr.bf16.mxu0 0
        %822 = vmatpush1.bf16.msra.mxu0 0
        %823 = vmatprep.subr.bf16.mxu0 0
        %824 = vmatpush1.bf16.msra.mxu0 0
        %825 = vmatprep.subr.bf16.mxu0 0
        %826 = vmatpush1.bf16.msra.mxu0 0
        %827 = vmatprep.subr.bf16.mxu0 0
        %828 = vmatpush1.bf16.msra.mxu0 0
        %829 = vmatprep.mubr.bf16.mxu0 0
        %830 = vmatmul.mubr.bf16.gmra.mrb[0].mxu0 %v522
        %v831 = vpop.f32.mrb[0].mxu0
        %v832 = vadd.f32 0.0, %v831
        %v833 = vpop.f32.mrb[0].mxu0
        %v834 = vadd.f32 0.0, %v833
        %v835 = vpop.f32.mrb[0].mxu0
        %v836 = vadd.f32 0.0, %v835
        %v837 = vpop.f32.mrb[0].mxu0
        %v838 = vadd.f32 0.0, %v837
        %839 = vdwg.mxu0
        %v840 = vmax.f32 %v832, %v836
        %v841 = vrot.slane %v840, 4
        %v842 = vmax.f32 %v840, %v841
        %v843 = vrot.slane %v842, 2
        %v844 = vmax.f32 %v842, %v843
        %v845 = vrot.slane %v844, 1
        %v846 = vmax.f32 %v844, %v845
        %v847 = vmax.f32 %v834, %v838
        %v848 = vrot.slane %v847, 4
        %v849 = vmax.f32 %v847, %v848
        %v850 = vrot.slane %v849, 2
        %v851 = vmax.f32 %v849, %v850
        %v852 = vrot.slane %v851, 1
        %v853 = vmax.f32 %v851, %v852
        %v854 = vld [vmem:[%s324 + $0x2] sm:$0x3]
        %v857 = vcombine.low %v846, %v853
        %v859 = vunpack.c.l.s4 1966171168
        %v860 = vunpack.c.0.s8 %v859
        %v861 = vlaneseq
        %v862 = vshrl.u32 %v861, 7
        %v863 = vsub.s32 %v860, %v862
        %v864 = vrot.slane %v857, %v863
        %v866 = vunpack.c.l.s4 1966171168
        %v867 = vunpack.c.0.s8 %v866
        %v868 = vlaneseq
        %v869 = vshrl.u32 %v868, 7
        %v870 = vsub.s32 %v867, %v869
        %v871 = vrot.slane %v864, %v870
        %v873 = vmax.f32 %v854, %v871
        %874 = vst.msk [vmem:[%s324 + $0x2] sm:$0x3] %vm699, %v873
        %v875 = vld [vmem:[#allocation5 + $0x10] sm:$0xff]
        %v876 = vld [vmem:[#allocation5 + $0x30] sm:$0xff]
        %v877 = vld [vmem:[#allocation5 + $0x50] sm:$0xff]
        %v878 = vld [vmem:[#allocation5 + $0x70] sm:$0xff]
        %v879 = vld [vmem:[#allocation5 + $0x90] sm:$0xff]
        %v880 = vld [vmem:[#allocation5 + $0xb0] sm:$0xff]
        %v881 = vld [vmem:[#allocation5 + $0xd0] sm:$0xff]
        %v882 = vld [vmem:[#allocation5 + $0xf0] sm:$0xff]
        %v883 = vld [vmem:[#allocation5 + $0x110] sm:$0xff]
        %v884 = vld [vmem:[#allocation5 + $0x130] sm:$0xff]
        %v885 = vld [vmem:[#allocation5 + $0x150] sm:$0xff]
        %v886 = vld [vmem:[#allocation5 + $0x170] sm:$0xff]
        %v887 = vld [vmem:[#allocation5 + $0x190] sm:$0xff]
        %v888 = vld [vmem:[#allocation5 + $0x1b0] sm:$0xff]
        %v889 = vld [vmem:[#allocation5 + $0x1d0] sm:$0xff]
        %v890 = vld [vmem:[#allocation5 + $0x1f0] sm:$0xff]
        %v907 = vunpack.c.l.b16 %v875
        %v908 = vunpack.c.h.b16 %v875
        %v909 = vunpack.c.l.b16 %v876
        %v910 = vunpack.c.h.b16 %v876
        %v911 = vunpack.c.l.b16 %v877
        %v912 = vunpack.c.h.b16 %v877
        %v913 = vunpack.c.l.b16 %v878
        %v914 = vunpack.c.h.b16 %v878
        %v915 = vunpack.c.l.b16 %v879
        %v916 = vunpack.c.h.b16 %v879
        %v917 = vunpack.c.l.b16 %v880
        %v918 = vunpack.c.h.b16 %v880
        %v919 = vunpack.c.l.b16 %v881
        %v920 = vunpack.c.h.b16 %v881
        %v921 = vunpack.c.l.b16 %v882
        %v922 = vunpack.c.h.b16 %v882
        %v923 = vunpack.c.l.b16 %v883
        %v924 = vunpack.c.h.b16 %v883
        %v925 = vunpack.c.l.b16 %v884
        %v926 = vunpack.c.h.b16 %v884
        %v927 = vunpack.c.l.b16 %v885
        %v928 = vunpack.c.h.b16 %v885
        %v929 = vunpack.c.l.b16 %v886
        %v930 = vunpack.c.h.b16 %v886
        %v931 = vunpack.c.l.b16 %v887
        %v932 = vunpack.c.h.b16 %v887
        %v933 = vunpack.c.l.b16 %v888
        %v934 = vunpack.c.h.b16 %v888
        %v935 = vunpack.c.l.b16 %v889
        %v936 = vunpack.c.h.b16 %v889
        %v937 = vunpack.c.l.b16 %v890
        %v938 = vunpack.c.h.b16 %v890
        %v939 = vpack.c.b16 %v909, %v907
        %v940 = vpack.c.b16 %v910, %v908
        %v941 = vpack.c.b16 %v913, %v911
        %v942 = vpack.c.b16 %v914, %v912
        %v943 = vpack.c.b16 %v917, %v915
        %v944 = vpack.c.b16 %v918, %v916
        %v945 = vpack.c.b16 %v921, %v919
        %v946 = vpack.c.b16 %v922, %v920
        %v947 = vpack.c.b16 %v925, %v923
        %v948 = vpack.c.b16 %v926, %v924
        %v949 = vpack.c.b16 %v929, %v927
        %v950 = vpack.c.b16 %v930, %v928
        %v951 = vpack.c.b16 %v933, %v931
        %v952 = vpack.c.b16 %v934, %v932
        %v953 = vpack.c.b16 %v937, %v935
        %v954 = vpack.c.b16 %v938, %v936
        %971 = vmatprep.subr.bf16.mxu0 %v940
        %972 = vmatpush1.bf16.msra.mxu0 %v939
        %973 = vmatprep.subr.bf16.mxu0 %v942
        %974 = vmatpush1.bf16.msra.mxu0 %v941
        %975 = vmatprep.subr.bf16.mxu0 %v944
        %976 = vmatpush1.bf16.msra.mxu0 %v943
        %977 = vmatprep.subr.bf16.mxu0 %v946
        %978 = vmatpush1.bf16.msra.mxu0 %v945
        %979 = vmatprep.subr.bf16.mxu0 %v948
        %980 = vmatpush1.bf16.msra.mxu0 %v947
        %981 = vmatprep.subr.bf16.mxu0 %v950
        %982 = vmatpush1.bf16.msra.mxu0 %v949
        %983 = vmatprep.subr.bf16.mxu0 %v952
        %984 = vmatpush1.bf16.msra.mxu0 %v951
        %985 = vmatprep.subr.bf16.mxu0 %v954
        %986 = vmatpush1.bf16.msra.mxu0 %v953
        %987 = vmatprep.subr.bf16.mxu0 0
        %988 = vmatpush1.bf16.msra.mxu0 0
        %989 = vmatprep.subr.bf16.mxu0 0
        %990 = vmatpush1.bf16.msra.mxu0 0
        %991 = vmatprep.subr.bf16.mxu0 0
        %992 = vmatpush1.bf16.msra.mxu0 0
        %993 = vmatprep.subr.bf16.mxu0 0
        %994 = vmatpush1.bf16.msra.mxu0 0
        %995 = vmatprep.subr.bf16.mxu0 0
        %996 = vmatpush1.bf16.msra.mxu0 0
        %997 = vmatprep.subr.bf16.mxu0 0
        %998 = vmatpush1.bf16.msra.mxu0 0
        %999 = vmatprep.subr.bf16.mxu0 0
        %1000 = vmatpush1.bf16.msra.mxu0 0
        %1001 = vmatprep.subr.bf16.mxu0 0
        %1002 = vmatpush1.bf16.msra.mxu0 0
        %1003 = vmatprep.mubr.bf16.mxu0 0
        %1004 = vmatmul.mubr.bf16.gmra.mrb[0].mxu0 %v522
        %v1005 = vpop.f32.mrb[0].mxu0
        %v1006 = vadd.f32 0.0, %v1005
        %v1007 = vpop.f32.mrb[0].mxu0
        %v1008 = vadd.f32 0.0, %v1007
        %v1009 = vpop.f32.mrb[0].mxu0
        %v1010 = vadd.f32 0.0, %v1009
        %v1011 = vpop.f32.mrb[0].mxu0
        %v1012 = vadd.f32 0.0, %v1011
        %1013 = vdwg.mxu0
        %v1014 = vmax.f32 %v1006, %v1010
        %v1015 = vrot.slane %v1014, 4
        %v1016 = vmax.f32 %v1014, %v1015
        %v1017 = vrot.slane %v1016, 2
        %v1018 = vmax.f32 %v1016, %v1017
        %v1019 = vrot.slane %v1018, 1
        %v1020 = vmax.f32 %v1018, %v1019
        %v1021 = vmax.f32 %v1008, %v1012
        %v1022 = vrot.slane %v1021, 4
        %v1023 = vmax.f32 %v1021, %v1022
        %v1024 = vrot.slane %v1023, 2
        %v1025 = vmax.f32 %v1023, %v1024
        %v1026 = vrot.slane %v1025, 1
        %v1027 = vmax.f32 %v1025, %v1026
        %v1028 = vld [vmem:[%s324 + $0x4] sm:$0x3]
        %v1031 = vcombine.low %v1020, %v1027
        %v1033 = vunpack.c.l.s4 1966171168
        %v1034 = vunpack.c.0.s8 %v1033
        %v1035 = vlaneseq
        %v1036 = vshrl.u32 %v1035, 7
        %v1037 = vsub.s32 %v1034, %v1036
        %v1038 = vrot.slane %v1031, %v1037
        %v1040 = vunpack.c.l.s4 1966171168
        %v1041 = vunpack.c.0.s8 %v1040
        %v1042 = vlaneseq
        %v1043 = vshrl.u32 %v1042, 7
        %v1044 = vsub.s32 %v1041, %v1043
        %v1045 = vrot.slane %v1038, %v1044
        %v1047 = vmax.f32 %v1028, %v1045
        %1048 = vst.msk [vmem:[%s324 + $0x4] sm:$0x3] %vm699, %v1047
        %v1049 = vld [vmem:[#allocation5 + $0x18] sm:$0xff]
        %v1050 = vld [vmem:[#allocation5 + $0x38] sm:$0xff]
        %v1051 = vld [vmem:[#allocation5 + $0x58] sm:$0xff]
        %v1052 = vld [vmem:[#allocation5 + $0x78] sm:$0xff]
        %v1053 = vld [vmem:[#allocation5 + $0x98] sm:$0xff]
        %v1054 = vld [vmem:[#allocation5 + $0xb8] sm:$0xff]
        %v1055 = vld [vmem:[#allocation5 + $0xd8] sm:$0xff]
        %v1056 = vld [vmem:[#allocation5 + $0xf8] sm:$0xff]
        %v1057 = vld [vmem:[#allocation5 + $0x118] sm:$0xff]
        %v1058 = vld [vmem:[#allocation5 + $0x138] sm:$0xff]
        %v1059 = vld [vmem:[#allocation5 + $0x158] sm:$0xff]
        %v1060 = vld [vmem:[#allocation5 + $0x178] sm:$0xff]
        %v1061 = vld [vmem:[#allocation5 + $0x198] sm:$0xff]
        %v1062 = vld [vmem:[#allocation5 + $0x1b8] sm:$0xff]
        %v1063 = vld [vmem:[#allocation5 + $0x1d8] sm:$0xff]
        %v1064 = vld [vmem:[#allocation5 + $0x1f8] sm:$0xff]
        %v1081 = vunpack.c.l.b16 %v1049
        %v1082 = vunpack.c.h.b16 %v1049
        %v1083 = vunpack.c.l.b16 %v1050
        %v1084 = vunpack.c.h.b16 %v1050
        %v1085 = vunpack.c.l.b16 %v1051
        %v1086 = vunpack.c.h.b16 %v1051
        %v1087 = vunpack.c.l.b16 %v1052
        %v1088 = vunpack.c.h.b16 %v1052
        %v1089 = vunpack.c.l.b16 %v1053
        %v1090 = vunpack.c.h.b16 %v1053
        %v1091 = vunpack.c.l.b16 %v1054
        %v1092 = vunpack.c.h.b16 %v1054
        %v1093 = vunpack.c.l.b16 %v1055
        %v1094 = vunpack.c.h.b16 %v1055
        %v1095 = vunpack.c.l.b16 %v1056
        %v1096 = vunpack.c.h.b16 %v1056
        %v1097 = vunpack.c.l.b16 %v1057
        %v1098 = vunpack.c.h.b16 %v1057
        %v1099 = vunpack.c.l.b16 %v1058
        %v1100 = vunpack.c.h.b16 %v1058
        %v1101 = vunpack.c.l.b16 %v1059
        %v1102 = vunpack.c.h.b16 %v1059
        %v1103 = vunpack.c.l.b16 %v1060
        %v1104 = vunpack.c.h.b16 %v1060
        %v1105 = vunpack.c.l.b16 %v1061
        %v1106 = vunpack.c.h.b16 %v1061
        %v1107 = vunpack.c.l.b16 %v1062
        %v1108 = vunpack.c.h.b16 %v1062
        %v1109 = vunpack.c.l.b16 %v1063
        %v1110 = vunpack.c.h.b16 %v1063
        %v1111 = vunpack.c.l.b16 %v1064
        %v1112 = vunpack.c.h.b16 %v1064
        %v1113 = vpack.c.b16 %v1083, %v1081
        %v1114 = vpack.c.b16 %v1084, %v1082
        %v1115 = vpack.c.b16 %v1087, %v1085
        %v1116 = vpack.c.b16 %v1088, %v1086
        %v1117 = vpack.c.b16 %v1091, %v1089
        %v1118 = vpack.c.b16 %v1092, %v1090
        %v1119 = vpack.c.b16 %v1095, %v1093
        %v1120 = vpack.c.b16 %v1096, %v1094
        %v1121 = vpack.c.b16 %v1099, %v1097
        %v1122 = vpack.c.b16 %v1100, %v1098
        %v1123 = vpack.c.b16 %v1103, %v1101
        %v1124 = vpack.c.b16 %v1104, %v1102
        %v1125 = vpack.c.b16 %v1107, %v1105
        %v1126 = vpack.c.b16 %v1108, %v1106
        %v1127 = vpack.c.b16 %v1111, %v1109
        %v1128 = vpack.c.b16 %v1112, %v1110
        %1145 = vmatprep.subr.bf16.mxu0 %v1114
        %1146 = vmatpush1.bf16.msra.mxu0 %v1113
        %1147 = vmatprep.subr.bf16.mxu0 %v1116
        %1148 = vmatpush1.bf16.msra.mxu0 %v1115
        %1149 = vmatprep.subr.bf16.mxu0 %v1118
        %1150 = vmatpush1.bf16.msra.mxu0 %v1117
        %1151 = vmatprep.subr.bf16.mxu0 %v1120
        %1152 = vmatpush1.bf16.msra.mxu0 %v1119
        %1153 = vmatprep.subr.bf16.mxu0 %v1122
        %1154 = vmatpush1.bf16.msra.mxu0 %v1121
        %1155 = vmatprep.subr.bf16.mxu0 %v1124
        %1156 = vmatpush1.bf16.msra.mxu0 %v1123
        %1157 = vmatprep.subr.bf16.mxu0 %v1126
        %1158 = vmatpush1.bf16.msra.mxu0 %v1125
        %1159 = vmatprep.subr.bf16.mxu0 %v1128
        %1160 = vmatpush1.bf16.msra.mxu0 %v1127
        %1161 = vmatprep.subr.bf16.mxu0 0
        %1162 = vmatpush1.bf16.msra.mxu0 0
        %1163 = vmatprep.subr.bf16.mxu0 0
        %1164 = vmatpush1.bf16.msra.mxu0 0
        %1165 = vmatprep.subr.bf16.mxu0 0
        %1166 = vmatpush1.bf16.msra.mxu0 0
        %1167 = vmatprep.subr.bf16.mxu0 0
        %1168 = vmatpush1.bf16.msra.mxu0 0
        %1169 = vmatprep.subr.bf16.mxu0 0
        %1170 = vmatpush1.bf16.msra.mxu0 0
        %1171 = vmatprep.subr.bf16.mxu0 0
        %1172 = vmatpush1.bf16.msra.mxu0 0
        %1173 = vmatprep.subr.bf16.mxu0 0
        %1174 = vmatpush1.bf16.msra.mxu0 0
        %1175 = vmatprep.subr.bf16.mxu0 0
        %1176 = vmatpush1.bf16.msra.mxu0 0
        %1177 = vmatprep.mubr.bf16.mxu0 0
        %1178 = vmatmul.mubr.bf16.gmra.mrb[0].mxu0 %v522
        %v1179 = vpop.f32.mrb[0].mxu0
        %v1180 = vadd.f32 0.0, %v1179
        %v1181 = vpop.f32.mrb[0].mxu0
        %v1182 = vadd.f32 0.0, %v1181
        %v1183 = vpop.f32.mrb[0].mxu0
        %v1184 = vadd.f32 0.0, %v1183
        %v1185 = vpop.f32.mrb[0].mxu0
        %v1186 = vadd.f32 0.0, %v1185
        %1187 = vdwg.mxu0
        %v1188 = vmax.f32 %v1180, %v1184
        %v1189 = vrot.slane %v1188, 4
        %v1190 = vmax.f32 %v1188, %v1189
        %v1191 = vrot.slane %v1190, 2
        %v1192 = vmax.f32 %v1190, %v1191
        %v1193 = vrot.slane %v1192, 1
        %v1194 = vmax.f32 %v1192, %v1193
        %v1195 = vmax.f32 %v1182, %v1186
        %v1196 = vrot.slane %v1195, 4
        %v1197 = vmax.f32 %v1195, %v1196
        %v1198 = vrot.slane %v1197, 2
        %v1199 = vmax.f32 %v1197, %v1198
        %v1200 = vrot.slane %v1199, 1
        %v1201 = vmax.f32 %v1199, %v1200
        %v1202 = vld [vmem:[%s324 + $0x6] sm:$0x3]
        %v1205 = vcombine.low %v1194, %v1201
        %v1207 = vunpack.c.l.s4 1966171168
        %v1208 = vunpack.c.0.s8 %v1207
        %v1209 = vlaneseq
        %v1210 = vshrl.u32 %v1209, 7
        %v1211 = vsub.s32 %v1208, %v1210
        %v1212 = vrot.slane %v1205, %v1211
        %v1214 = vunpack.c.l.s4 1966171168
        %v1215 = vunpack.c.0.s8 %v1214
        %v1216 = vlaneseq
        %v1217 = vshrl.u32 %v1216, 7
        %v1218 = vsub.s32 %v1215, %v1217
        %v1219 = vrot.slane %v1212, %v1218
        %v1221 = vmax.f32 %v1202, %v1219
        %1222 = vst.msk [vmem:[%s324 + $0x6] sm:$0x3] %vm699, %v1221
        // Predicated region
        $region61: #{tpu_custom_call.1} parent=47 // pred_check
          %p1223 = pneg %p336
        $region62: #{tpu_custom_call.1} parent=47 // pred_check_branch
          %1225 = sbr.rel (%p1223) target = $region64
        $region63: #{tpu_custom_call.1} parent=47 // pred_region
          %v1226 = vld [vmem:[%s324] sm:$0xff]
          %v1227 = vld [vmem:[%s6] sm:$0xff]
          %v1228 = vadd.f32 %v1226, %v1227
          %1229 = vst [vmem:[%s324] sm:$0xff] %v1228
        $region64: #{tpu_custom_call.1} parent=47 // pred_fallthru
          _
        %s1230 = sand.u32 %s197, 1
        %s1231 = scalar_lea.sflag [#allocation4], %s1230
        %s1232 = sand.u32 %s197, 1
        %s1233 = smul.addr %s1232, 8
        %s1234 = scalar_lea.vmem [#allocation7], %s1233
        // Predicated region
        $region65: #{tpu_custom_call.1} parent=47 // pred_check
          %p1235 = pneg %p207
        $region66: #{tpu_custom_call.1} parent=47 // pred_check_branch
          %1237 = sbr.rel (%p1235) target = $region68
        $region67: #{tpu_custom_call.1} parent=47 // pred_region
          %s1239 = ssub.s32 128, 128
          %1240 = vsyncadd %s1231, %s1239
          %s1241 = smul.addr %s27, 8
          %s1242 = smul.addr %s1241, 16
          %s1243 = scalar_lea.hbm %s7, %s1242
          %s1245 = sshll.u32 %s1234, 4
          %s1246 = int_to_ptr.vmem [resolvable:$true] %s1245
          %1248 = dma.vmem_to_hbm [thread:$0]  %s1246, 128, %s1243, %s1231
        $region68: #{tpu_custom_call.1} parent=47 // pred_fallthru
          _
      $region48: #{tpu_custom_call.1} parent=5 // pred_fallthru
        _
      %p1249 = scmp.le.s32.totalorder 2, %s18
      // Predicated region
      $region69: #{tpu_custom_call.1} parent=5 // pred_check
        %p1250 = pneg %p1249
      $region70: #{tpu_custom_call.1} parent=5 // pred_check_branch
        %1252 = sbr.rel (%p1250) target = $region72
      $region71: #{tpu_custom_call.1} parent=5 // pred_region
        %s1253 = ssub.s32 %s18, 2
        // Predicated region
        $region73: #{tpu_custom_call.1} parent=71 // pred_check
          %p1254 = pneg %p213
        $region74: #{tpu_custom_call.1} parent=71 // pred_check_branch
          %1256 = sbr.rel (%p1254) target = $region76
        $region75: #{tpu_custom_call.1} parent=71 // pred_region
          %s1257 = sand.u32 %s198, 1
          %s1258 = scalar_lea.sflag [#allocation4], %s1257
          %s1259 = sand.u32 %s198, 1
          %s1260 = smul.addr %s1259, 8
          %s1261 = scalar_lea.vmem [#allocation7], %s1260
          %1262 = dma.done %s1258, 128
        $region76: #{tpu_custom_call.1} parent=71 // pred_fallthru
          _
      $region72: #{tpu_custom_call.1} parent=5 // pred_fallthru
        _
    $region6: #{tpu_custom_call.1} parent=1 // loop_footer
      %s22 = sadd.s32 1, %s18
    $region7: #{tpu_custom_call.1} parent=1 // loop_footer_branch
      %17 = sbr.rel target = $region3
    $region8: #{tpu_custom_call.1} parent=1 // loop_exit
      _
    %1263 = vsyncpa [#allocation3], 1
    %s1264 = scalar_lea.sflag [#allocation3], 1
    %1265 = vsyncpa %s1264, 1
    %1266 = vsyncpa [#allocation6], 1
    %1267 = vsyncpa [#allocation4], 1
    %s1268 = scalar_lea.sflag [#allocation4], 1
    %1269 = vsyncpa %s1268, 1

</llo_original>
